<compile_context>
chip_gen: v6e
topology: v6e:2x2x1
jax: 0.10.0
libtpu: 0.0.40
codegen_flags: <defaults>
</compile_context>

<pallas_src>
import functools

import jax
import jax.numpy as jnp
import numpy as np
from jax import lax
from jax.experimental import pallas as pl
from jax.experimental.pallas import tpu as pltpu


# ----------------------------------------------------------------------------
# Pallas kernel
# ----------------------------------------------------------------------------
def _complex_lstm_kernel(xs_ref, wih_ref, whh_ref,      # inputs
                         out_ref,                       # output (raw h history)
                         h_scr, c_scr, xp_scr,          # scratch
                         *, batch, hidden, t_tile, unroll):
    B, H = batch, hidden
    B2, B4, H3 = 2 * batch, 4 * batch, 3 * hidden

    # Zero the recurrent state only on the first time tile; the VMEM scratch
    # persists across grid steps and carries (h, c) between tiles.
    @pl.when(pl.program_id(0) == 0)
    def _():
        h_scr[...] = jnp.zeros_like(h_scr)   # packed (4B, 2H); zeros are valid
        c_scr[...] = jnp.zeros_like(c_scr)

    # ---- Phase 1 (parallel over time): stream-stacked input projection ----
    # xs rows per step are [rr(B); ri(B); ir(B); ii(B)], block-diagonal over
    # 2I input lanes plus 2 indicator lanes that pick up the fused biases, so
    # the projection lands fully formed in xp_scr: the serial loop needs no
    # lane slices or sublane concatenates for xg.
    xp_scr[...] = jnp.dot(xs_ref[...], wih_ref[...],
                          preferred_element_type=jnp.float32)

    whh = whh_ref[...]          # (2H, 4H) bf16, block-diag rows [whh_re; whh_im]

    # Constant lane mask that re-packs h_new into the block-diagonal (4B, 2H)
    # layout: re-weight streams (rows < 2B) live in lanes [0, H), im-weight
    # streams in lanes [H, 2H).  Hoisted out of the serial loop.
    row = lax.broadcasted_iota(jnp.int32, (B4, 2 * H), 0)
    col = lax.broadcasted_iota(jnp.int32, (B4, 2 * H), 1)
    pack_mask = ((row < B2) == (col < H)).astype(jnp.float32)

    # ---- Phase 2 (serial): recurrence, one MXU push per timestep ----------
    def step(t, carry):
        h_pack, c = carry                                    # (4B,2H), (4B,H) f32
        # Block-diagonal whh: every result column is used; only 4H columns
        # drained from the MXU per step.
        hg = jnp.dot(h_pack.astype(whh.dtype), whh,
                     preferred_element_type=jnp.float32)     # (4B, 4H)
        r0 = pl.multiple_of(t * B4, B4)
        gates = xp_scr[pl.ds(r0, B4), :] + hg                # (4B, 4H), [i|f|o|g]
        ifo = jax.nn.sigmoid(gates[:, :H3])                  # one EUP region (3H)
        g = jnp.tanh(gates[:, H3:])                          # one EUP region (H)
        c_new = ifo[:, H:2 * H] * c + ifo[:, :H] * g         # f*c + i*g
        h_new = ifo[:, 2 * H:] * jnp.tanh(c_new)             # o * tanh(c_new)
        # Raw per-stream hidden state; real/imag packing is done in the
        # wrapper, off the serial critical path.
        out_ref[pl.ds(r0, B4), :] = h_new                    # (4B, H) dense rows
        h_pack_new = jnp.concatenate([h_new, h_new], axis=-1) * pack_mask
        return h_pack_new, c_new

    h, c = lax.fori_loop(0, t_tile, step, (h_scr[...], c_scr[...]),
                         unroll=unroll)
    h_scr[...] = h
    c_scr[...] = c


# ----------------------------------------------------------------------------
# Wrapper helpers
# ----------------------------------------------------------------------------
def _vmem_capacity_bytes():
    try:
        return int(pltpu.get_tpu_info().vmem_capacity_bytes)
    except Exception:
        return 64 * 1024 * 1024          # conservative default (v7x per-core)


def _pad(n, m):
    return ((n + m - 1) // m) * m


def _pick_t_tile(seq_len, batch, in_cols, hidden, budget_bytes):
    """Largest time tile (divisor of T) whose VMEM footprint fits the budget."""

    def footprint(tt):
        rows = _pad(tt * 4 * batch, 8)
        xp = rows * _pad(4 * hidden, 128) * 4                 # f32 xp scratch
        xs = 2 * rows * _pad(in_cols, 128) * 2                # bf16 in, dbl-buf
        out = 2 * rows * _pad(hidden, 128) * 4                # f32 out, dbl-buf
        wts = 2 * (_pad(in_cols, 8) + _pad(2 * hidden, 8)) * _pad(4 * hidden, 128) * 2
        state = _pad(4 * batch, 8) * _pad(3 * hidden, 128) * 4
        return xp + xs + out + wts + state

    def legal(tt):
        return (seq_len % tt == 0 and
                ((tt * 4 * batch) % 8 == 0 or tt == seq_len))

    for tt in range(seq_len, 0, -1):       # biggest legal tile that fits
        if legal(tt) and footprint(tt) <= budget_bytes:
            return tt
    for tt in range(1, seq_len + 1):       # nothing fits: shrink, never grow
        if legal(tt):
            return tt
    return seq_len


def _perm_gates_ifog(w):
    """Reorder gate columns from PyTorch [i|f|g|o] to kernel [i|f|o|g]."""
    H = w.shape[-1] // 4
    return jnp.concatenate([w[..., :2 * H], w[..., 3 * H:], w[..., 2 * H:3 * H]],
                           axis=-1)


# ----------------------------------------------------------------------------
# Wrapper
# ----------------------------------------------------------------------------
@jax.jit
def complex_lstm_forward(x, params):
    """x: (B, T, I, 2) float32 -> (B, T, H, 2) float32."""
    B, T, I, _ = x.shape
    H = params["whh_re"].shape[0]
    C = 2 * I + 2          # packed input lanes: [x_re | x_im | b_re_ind | b_im_ind]

    # ---- trace-time weight packing (gate order [i|f|o|g]) ------------------
    wih_re = _perm_gates_ifog(params["wih_re"])
    wih_im = _perm_gates_ifog(params["wih_im"])
    whh_re = _perm_gates_ifog(params["whh_re"])
    whh_im = _perm_gates_ifog(params["whh_im"])
    b_re = _perm_gates_ifog(params["b_re"])
    b_im = _perm_gates_ifog(params["b_im"])

    wih_pack = jnp.concatenate([wih_re, wih_im, b_re, b_im],
                               axis=0).astype(jnp.bfloat16)      # (2I+2, 4H)
    whh_bd = jnp.concatenate([whh_re, whh_im],
                             axis=0).astype(jnp.bfloat16)        # (2H, 4H)

    # ---- trace-time input packing: step-major, stream-stacked rows ---------
    # Per step the 4B rows are [rr(B); ri(B); ir(B); ii(B)]; the block-diag
    # placement over the 2I input lanes selects the re/im weight set and the
    # indicator lanes select the fused bias, all inside one Phase-1 matmul.
    x_re, x_im = x[..., 0], x[..., 1]                            # (B, T, I)
    z = jnp.zeros_like(x_re)
    one = jnp.ones(x_re.shape[:2] + (1,), x.dtype)
    zr1 = jnp.zeros_like(one)
    streams = jnp.stack([
        jnp.concatenate([x_re, z, one, zr1], axis=-1),   # rr: x_re @ W_re + b_re
        jnp.concatenate([x_im, z, one, zr1], axis=-1),   # ri: x_im @ W_re + b_re
        jnp.concatenate([z, x_re, zr1, one], axis=-1),   # ir: x_re @ W_im + b_im
        jnp.concatenate([z, x_im, zr1, one], axis=-1),   # ii: x_im @ W_im + b_im
    ], axis=0)                                           # (4, B, T, 2I+2)
    xs = jnp.transpose(streams, (2, 0, 1, 3)).reshape(T * 4 * B, C)
    xs = xs.astype(jnp.bfloat16)

    # ---- generation-aware tiling -------------------------------------------
    vmem_cap = _vmem_capacity_bytes()
    vmem_limit = min(int(vmem_cap * 0.85), 112 * 1024 * 1024)
    t_tile = _pick_t_tile(T, B, C, H, int(vmem_limit * 0.8))
    n_blk = T // t_tile

    # H-aware unroll: deep unroll only while state + gates stay in few vregs.
    if H <= 64:
        unroll = min(t_tile, 8)
    elif H <= 128:
        unroll = min(t_tile, 4)
    else:
        unroll = min(t_tile, 2)

    kernel = functools.partial(_complex_lstm_kernel, batch=B, hidden=H,
                               t_tile=t_tile, unroll=unroll)

    out_raw = pl.pallas_call(
        kernel,
        out_shape=jax.ShapeDtypeStruct((T * 4 * B, H), jnp.float32),
        grid_spec=pltpu.PrefetchScalarGridSpec(
            num_scalar_prefetch=0,
            grid=(n_blk,),
            in_specs=[
                pl.BlockSpec((t_tile * 4 * B, C), lambda t: (t, 0)),   # xs tile
                pl.BlockSpec((C, 4 * H), lambda t: (0, 0)),            # wih_pack
                pl.BlockSpec((2 * H, 4 * H), lambda t: (0, 0)),        # whh_bd
            ],
            out_specs=pl.BlockSpec((t_tile * 4 * B, H), lambda t: (t, 0)),
            scratch_shapes=[
                pltpu.VMEM((4 * B, 2 * H), jnp.float32),               # packed h
                pltpu.VMEM((4 * B, H), jnp.float32),                   # c
                pltpu.VMEM((t_tile * 4 * B, 4 * H), jnp.float32),      # x-proj
            ]),
        compiler_params=pltpu.CompilerParams(
            dimension_semantics=("arbitrary",),
            vmem_limit_bytes=vmem_limit),
    )(xs, wih_pack, whh_bd)

    # ---- real/imag packing off the critical path (cheap XLA epilogue) ------
    hraw = out_raw.reshape(T, 4, B, H)
    real = hraw[:, 0] - hraw[:, 3]                     # rr - ii
    imag = hraw[:, 1] - hraw[:, 2]                     # ri - ir
    out = jnp.stack([real, imag], axis=-1)             # (T, B, H, 2)
    return jnp.transpose(out, (1, 0, 2, 3))            # (B, T, H, 2)


# ----------------------------------------------------------------------------
# Deterministic parameter init (same shapes/distribution as nn.LSTM)
# ----------------------------------------------------------------------------
def init_params(key, input_size, hidden_size):
    k = 1.0 / np.sqrt(hidden_size)

    def _one_lstm(key):
        k1, k2, k3, k4 = jax.random.split(key, 4)
        w_ih = jax.random.uniform(k1, (4 * hidden_size, input_size), jnp.float32, -k, k)
        w_hh = jax.random.uniform(k2, (4 * hidden_size, hidden_size), jnp.float32, -k, k)
        b_ih = jax.random.uniform(k3, (4 * hidden_size,), jnp.float32, -k, k)
        b_hh = jax.random.uniform(k4, (4 * hidden_size,), jnp.float32, -k, k)
        # kernel consumes transposed weights and the fused bias
        return w_ih.T, w_hh.T, (b_ih + b_hh).reshape(1, 4 * hidden_size)

    k_re, k_im = jax.random.split(key)
    wih_re, whh_re, b_re = _one_lstm(k_re)
    wih_im, whh_im, b_im = _one_lstm(k_im)
    return dict(wih_re=wih_re, whh_re=whh_re, b_re=b_re,
                wih_im=wih_im, whh_im=whh_im, b_im=b_im)


# ----------------------------------------------------------------------------
# Pure-JAX reference (f32) for a correctness check against the kernel
# ----------------------------------------------------------------------------
def _lstm_ref(x, wih, whh, b):
    B, T, I = x.shape
    H = whh.shape[0]

    def step(carry, x_t):
        h, c = carry
        gates = x_t @ wih + h @ whh + b
        i = jax.nn.sigmoid(gates[:, :H])
        f = jax.nn.sigmoid(gates[:, H:2 * H])
        g = jnp.tanh(gates[:, 2 * H:3 * H])
        o = jax.nn.sigmoid(gates[:, 3 * H:])
        c = f * c + i * g
        h = o * jnp.tanh(c)
        return (h, c), h

    xs = jnp.transpose(x, (1, 0, 2))
    (_, _), hs = lax.scan(step, (jnp.zeros((B, H)), jnp.zeros((B, H))), xs)
    return jnp.transpose(hs, (1, 0, 2))


def complex_lstm_ref(x, params):
    x_r, x_i = x[..., 0], x[..., 1]
    rr = _lstm_ref(x_r, params["wih_re"], params["whh_re"], params["b_re"])
    ii = _lstm_ref(x_i, params["wih_im"], params["whh_im"], params["b_im"])
    ri = _lstm_ref(x_i, params["wih_re"], params["whh_re"], params["b_re"])
    ir = _lstm_ref(x_r, params["wih_im"], params["whh_im"], params["b_im"])
    return jnp.stack((rr - ii, ri - ir), axis=-1)


# ----------------------------------------------------------------------------
if __name__ == "__main__":
    B, T, I, H = 2, 8, 16, 32   # batch, seq, input_size, hidden_size
    key = jax.random.PRNGKey(0)
    k_x, k_p = jax.random.split(key)

    x = jax.random.normal(k_x, (B, T, I, 2), jnp.float32)
    params = init_params(k_p, I, H)

    out = complex_lstm_forward(x, params)
    out = jax.block_until_ready(out)

    assert out.shape == (B, T, H, 2), out.shape

    ref = complex_lstm_ref(x, params)
    # bf16 matmul operands / fused bias (f32 accumulation) -> looser tolerance.
    np.testing.assert_allclose(np.asarray(out), np.asarray(ref),
                               atol=3e-2, rtol=3e-2)

    print("KERNEL_OK")
</pallas_src>

<mosaic_0001>
module attributes {stable_mosaic.version = 11 : i64} {
  func.func @_complex_lstm_kernel(%arg0: i32, %arg1: memref<64x34xbf16, #tpu.memory_space<vmem>>, %arg2: memref<34x128xbf16, #tpu.memory_space<vmem>>, %arg3: memref<64x128xbf16, #tpu.memory_space<vmem>>, %arg4: memref<64x32xf32, #tpu.memory_space<vmem>>, %arg5: memref<8x64xf32, #tpu.memory_space<vmem>>, %arg6: memref<8x32xf32, #tpu.memory_space<vmem>>, %arg7: memref<64x128xf32, #tpu.memory_space<vmem>>) attributes {dimension_semantics = [#tpu.dimension_semantics<arbitrary>], iteration_bounds = array<i64: 1>, scalar_prefetch = 0 : i64, scratch_operands = 3 : i64, tpu.core_type = #tpu.core_type<tc>, window_params = [{transform_indices = @transform_0, window_bounds = array<i64: 64, 34>}, {pipeline_mode = #tpu.pipeline_mode<synchronous>, transform_indices = @transform_1, window_bounds = array<i64: 34, 128>}, {pipeline_mode = #tpu.pipeline_mode<synchronous>, transform_indices = @transform_2, window_bounds = array<i64: 64, 128>}, {transform_indices = @transform_3, window_bounds = array<i64: 64, 32>}]} {
    %c0_i32 = arith.constant 0 : i32
    %0 = arith.cmpi eq, %arg0, %c0_i32 : i32
    %1 = arith.extui %0 : i1 to i32
    %c0_i32_0 = arith.constant 0 : i32
    %2 = arith.cmpi ne, %1, %c0_i32_0 : i32
    scf.if %2 {
      %cst_59 = arith.constant 0.000000e+00 : f32
      %238 = vector.broadcast %cst_59 : f32 to vector<8x64xf32>
      %c0_60 = arith.constant 0 : index
      %c0_61 = arith.constant 0 : index
      %239 = vector.load %arg5[%c0_60, %c0_61] : memref<8x64xf32, #tpu.memory_space<vmem>>, vector<8x64xf32>
      tpu.vector_store %arg5[%c0_60, %c0_61], %238 {strides = array<i32>} : memref<8x64xf32, #tpu.memory_space<vmem>>, vector<8x64xf32>,
      %cst_62 = arith.constant 0.000000e+00 : f32
      %240 = vector.broadcast %cst_62 : f32 to vector<8x32xf32>
      %c0_63 = arith.constant 0 : index
      %c0_64 = arith.constant 0 : index
      %241 = vector.load %arg6[%c0_63, %c0_64] : memref<8x32xf32, #tpu.memory_space<vmem>>, vector<8x32xf32>
      tpu.vector_store %arg6[%c0_63, %c0_64], %240 {strides = array<i32>} : memref<8x32xf32, #tpu.memory_space<vmem>>, vector<8x32xf32>,
    } else {
    }
    %c0 = arith.constant 0 : index
    %c0_1 = arith.constant 0 : index
    %3 = vector.load %arg1[%c0, %c0_1] : memref<64x34xbf16, #tpu.memory_space<vmem>>, vector<64x34xbf16>
    %c0_2 = arith.constant 0 : index
    %c0_3 = arith.constant 0 : index
    %4 = vector.load %arg2[%c0_2, %c0_3] : memref<34x128xbf16, #tpu.memory_space<vmem>>, vector<34x128xbf16>
    %cst = arith.constant dense<0.000000e+00> : vector<64x128xf32>
    %5 = tpu.matmul %3, %4, %cst {dimension_numbers = #tpu.dot_dimension_numbers<[1], [0], [0], [1], [0, 0, 1, 1], [], []>} : vector<64x34xbf16>, vector<34x128xbf16>, vector<64x128xf32> -> vector<64x128xf32>
    %c0_4 = arith.constant 0 : index
    %c0_5 = arith.constant 0 : index
    %6 = vector.load %arg7[%c0_4, %c0_5] : memref<64x128xf32, #tpu.memory_space<vmem>>, vector<64x128xf32>
    tpu.vector_store %arg7[%c0_4, %c0_5], %5 {strides = array<i32>} : memref<64x128xf32, #tpu.memory_space<vmem>>, vector<64x128xf32>,
    %c0_6 = arith.constant 0 : index
    %c0_7 = arith.constant 0 : index
    %7 = vector.load %arg3[%c0_6, %c0_7] : memref<64x128xbf16, #tpu.memory_space<vmem>>, vector<64x128xbf16>
    %8 = tpu.iota {dimensions = array<i32: 0>} : vector<8x64xi32>
    %9 = tpu.iota {dimensions = array<i32: 1>} : vector<8x64xi32>
    %c4_i32 = arith.constant 4 : i32
    %10 = vector.broadcast %c4_i32 : i32 to vector<8x64xi32>
    %11 = arith.cmpi slt, %8, %10 : vector<8x64xi32>
    %c32_i32 = arith.constant 32 : i32
    %12 = vector.broadcast %c32_i32 : i32 to vector<8x64xi32>
    %13 = arith.cmpi slt, %9, %12 : vector<8x64xi32>
    %14 = arith.xori %11, %13 : vector<8x64xi1>
    %cst_8 = arith.constant dense<true> : vector<8x64xi1>
    %15 = arith.xori %14, %cst_8 : vector<8x64xi1>
    %16 = arith.extui %15 : vector<8x64xi1> to vector<8x64xi32>
    %17 = arith.sitofp %16 : vector<8x64xi32> to vector<8x64xf32>
    %c0_9 = arith.constant 0 : index
    %c0_10 = arith.constant 0 : index
    %18 = vector.load %arg5[%c0_9, %c0_10] : memref<8x64xf32, #tpu.memory_space<vmem>>, vector<8x64xf32>
    %c0_11 = arith.constant 0 : index
    %c0_12 = arith.constant 0 : index
    %19 = vector.load %arg6[%c0_11, %c0_12] : memref<8x32xf32, #tpu.memory_space<vmem>>, vector<8x32xf32>
    %c0_i32_13 = arith.constant 0 : i32
    %20 = arith.truncf %18 : vector<8x64xf32> to vector<8x64xbf16>
    %cst_14 = arith.constant dense<0.000000e+00> : vector<8x128xf32>
    %21 = tpu.matmul %20, %7, %cst_14 {dimension_numbers = #tpu.dot_dimension_numbers<[1], [0], [0], [1], [0, 0, 1, 1], [], []>} : vector<8x64xbf16>, vector<64x128xbf16>, vector<8x128xf32> -> vector<8x128xf32>
    %c8_i32 = arith.constant 8 : i32
    %22 = arith.muli %c0_i32_13, %c8_i32 : i32
    %23 = tpu.assume_multiple %22, 8 : i32
    %24 = arith.index_cast %23 : i32 to index
    %c0_15 = arith.constant 0 : index
    %25 = vector.load %arg7[%24, %c0_15] : memref<64x128xf32, #tpu.memory_space<vmem>>, vector<8x128xf32>
    %26 = arith.addf %25, %21 : vector<8x128xf32>
    %27 = vector.extract_strided_slice %26 {offsets = [0, 0], sizes = [8, 96], strides = [1, 1]} : vector<8x128xf32> to vector<8x96xf32>
    %28 = arith.negf %27 : vector<8x96xf32>
    %29 = math.exp %28 : vector<8x96xf32>
    %cst_16 = arith.constant 1.000000e+00 : f32
    %30 = vector.broadcast %cst_16 : f32 to vector<8x96xf32>
    %31 = arith.addf %30, %29 : vector<8x96xf32>
    %32 = arith.divf %30, %31 : vector<8x96xf32>
    %33 = vector.extract_strided_slice %26 {offsets = [0, 96], sizes = [8, 32], strides = [1, 1]} : vector<8x128xf32> to vector<8x32xf32>
    %34 = math.tanh %33 : vector<8x32xf32>
    %35 = vector.extract_strided_slice %32 {offsets = [0, 32], sizes = [8, 32], strides = [1, 1]} : vector<8x96xf32> to vector<8x32xf32>
    %36 = arith.mulf %35, %19 : vector<8x32xf32>
    %37 = vector.extract_strided_slice %32 {offsets = [0, 0], sizes = [8, 32], strides = [1, 1]} : vector<8x96xf32> to vector<8x32xf32>
    %38 = arith.mulf %37, %34 : vector<8x32xf32>
    %39 = arith.addf %36, %38 : vector<8x32xf32>
    %40 = vector.extract_strided_slice %32 {offsets = [0, 64], sizes = [8, 32], strides = [1, 1]} : vector<8x96xf32> to vector<8x32xf32>
    %41 = math.tanh %39 : vector<8x32xf32>
    %42 = arith.mulf %40, %41 : vector<8x32xf32>
    %43 = arith.index_cast %23 : i32 to index
    %c0_17 = arith.constant 0 : index
    %44 = vector.load %arg4[%43, %c0_17] : memref<64x32xf32, #tpu.memory_space<vmem>>, vector<8x32xf32>
    tpu.vector_store %arg4[%43, %c0_17], %42 {strides = array<i32>} : memref<64x32xf32, #tpu.memory_space<vmem>>, vector<8x32xf32>,
    %45 = tpu.concatenate %42, %42 in 1 : vector<8x32xf32>, vector<8x32xf32> -> vector<8x64xf32>
    %46 = arith.mulf %45, %17 : vector<8x64xf32>
    %c1_i32 = arith.constant 1 : i32
    %47 = arith.truncf %46 : vector<8x64xf32> to vector<8x64xbf16>
    %cst_18 = arith.constant dense<0.000000e+00> : vector<8x128xf32>
    %48 = tpu.matmul %47, %7, %cst_18 {dimension_numbers = #tpu.dot_dimension_numbers<[1], [0], [0], [1], [0, 0, 1, 1], [], []>} : vector<8x64xbf16>, vector<64x128xbf16>, vector<8x128xf32> -> vector<8x128xf32>
    %c8_i32_19 = arith.constant 8 : i32
    %49 = arith.muli %c1_i32, %c8_i32_19 : i32
    %50 = tpu.assume_multiple %49, 8 : i32
    %51 = arith.index_cast %50 : i32 to index
    %c0_20 = arith.constant 0 : index
    %52 = vector.load %arg7[%51, %c0_20] : memref<64x128xf32, #tpu.memory_space<vmem>>, vector<8x128xf32>
    %53 = arith.addf %52, %48 : vector<8x128xf32>
    %54 = vector.extract_strided_slice %53 {offsets = [0, 0], sizes = [8, 96], strides = [1, 1]} : vector<8x128xf32> to vector<8x96xf32>
    %55 = arith.negf %54 : vector<8x96xf32>
    %56 = math.exp %55 : vector<8x96xf32>
    %cst_21 = arith.constant 1.000000e+00 : f32
    %57 = vector.broadcast %cst_21 : f32 to vector<8x96xf32>
    %58 = arith.addf %57, %56 : vector<8x96xf32>
    %59 = arith.divf %57, %58 : vector<8x96xf32>
    %60 = vector.extract_strided_slice %53 {offsets = [0, 96], sizes = [8, 32], strides = [1, 1]} : vector<8x128xf32> to vector<8x32xf32>
    %61 = math.tanh %60 : vector<8x32xf32>
    %62 = vector.extract_strided_slice %59 {offsets = [0, 32], sizes = [8, 32], strides = [1, 1]} : vector<8x96xf32> to vector<8x32xf32>
    %63 = arith.mulf %62, %39 : vector<8x32xf32>
    %64 = vector.extract_strided_slice %59 {offsets = [0, 0], sizes = [8, 32], strides = [1, 1]} : vector<8x96xf32> to vector<8x32xf32>
    %65 = arith.mulf %64, %61 : vector<8x32xf32>
    %66 = arith.addf %63, %65 : vector<8x32xf32>
    %67 = vector.extract_strided_slice %59 {offsets = [0, 64], sizes = [8, 32], strides = [1, 1]} : vector<8x96xf32> to vector<8x32xf32>
    %68 = math.tanh %66 : vector<8x32xf32>
    %69 = arith.mulf %67, %68 : vector<8x32xf32>
    %70 = arith.index_cast %50 : i32 to index
    %c0_22 = arith.constant 0 : index
    %71 = vector.load %arg4[%70, %c0_22] : memref<64x32xf32, #tpu.memory_space<vmem>>, vector<8x32xf32>
    tpu.vector_store %arg4[%70, %c0_22], %69 {strides = array<i32>} : memref<64x32xf32, #tpu.memory_space<vmem>>, vector<8x32xf32>,
    %72 = tpu.concatenate %69, %69 in 1 : vector<8x32xf32>, vector<8x32xf32> -> vector<8x64xf32>
    %73 = arith.mulf %72, %17 : vector<8x64xf32>
    %c2_i32 = arith.constant 2 : i32
    %74 = arith.truncf %73 : vector<8x64xf32> to vector<8x64xbf16>
    %cst_23 = arith.constant dense<0.000000e+00> : vector<8x128xf32>
    %75 = tpu.matmul %74, %7, %cst_23 {dimension_numbers = #tpu.dot_dimension_numbers<[1], [0], [0], [1], [0, 0, 1, 1], [], []>} : vector<8x64xbf16>, vector<64x128xbf16>, vector<8x128xf32> -> vector<8x128xf32>
    %c8_i32_24 = arith.constant 8 : i32
    %76 = arith.muli %c2_i32, %c8_i32_24 : i32
    %77 = tpu.assume_multiple %76, 8 : i32
    %78 = arith.index_cast %77 : i32 to index
    %c0_25 = arith.constant 0 : index
    %79 = vector.load %arg7[%78, %c0_25] : memref<64x128xf32, #tpu.memory_space<vmem>>, vector<8x128xf32>
    %80 = arith.addf %79, %75 : vector<8x128xf32>
    %81 = vector.extract_strided_slice %80 {offsets = [0, 0], sizes = [8, 96], strides = [1, 1]} : vector<8x128xf32> to vector<8x96xf32>
    %82 = arith.negf %81 : vector<8x96xf32>
    %83 = math.exp %82 : vector<8x96xf32>
    %cst_26 = arith.constant 1.000000e+00 : f32
    %84 = vector.broadcast %cst_26 : f32 to vector<8x96xf32>
    %85 = arith.addf %84, %83 : vector<8x96xf32>
    %86 = arith.divf %84, %85 : vector<8x96xf32>
    %87 = vector.extract_strided_slice %80 {offsets = [0, 96], sizes = [8, 32], strides = [1, 1]} : vector<8x128xf32> to vector<8x32xf32>
    %88 = math.tanh %87 : vector<8x32xf32>
    %89 = vector.extract_strided_slice %86 {offsets = [0, 32], sizes = [8, 32], strides = [1, 1]} : vector<8x96xf32> to vector<8x32xf32>
    %90 = arith.mulf %89, %66 : vector<8x32xf32>
    %91 = vector.extract_strided_slice %86 {offsets = [0, 0], sizes = [8, 32], strides = [1, 1]} : vector<8x96xf32> to vector<8x32xf32>
    %92 = arith.mulf %91, %88 : vector<8x32xf32>
    %93 = arith.addf %90, %92 : vector<8x32xf32>
    %94 = vector.extract_strided_slice %86 {offsets = [0, 64], sizes = [8, 32], strides = [1, 1]} : vector<8x96xf32> to vector<8x32xf32>
    %95 = math.tanh %93 : vector<8x32xf32>
    %96 = arith.mulf %94, %95 : vector<8x32xf32>
    %97 = arith.index_cast %77 : i32 to index
    %c0_27 = arith.constant 0 : index
    %98 = vector.load %arg4[%97, %c0_27] : memref<64x32xf32, #tpu.memory_space<vmem>>, vector<8x32xf32>
    tpu.vector_store %arg4[%97, %c0_27], %96 {strides = array<i32>} : memref<64x32xf32, #tpu.memory_space<vmem>>, vector<8x32xf32>,
    %99 = tpu.concatenate %96, %96 in 1 : vector<8x32xf32>, vector<8x32xf32> -> vector<8x64xf32>
    %100 = arith.mulf %99, %17 : vector<8x64xf32>
    %c3_i32 = arith.constant 3 : i32
    %101 = arith.truncf %100 : vector<8x64xf32> to vector<8x64xbf16>
    %cst_28 = arith.constant dense<0.000000e+00> : vector<8x128xf32>
    %102 = tpu.matmul %101, %7, %cst_28 {dimension_numbers = #tpu.dot_dimension_numbers<[1], [0], [0], [1], [0, 0, 1, 1], [], []>} : vector<8x64xbf16>, vector<64x128xbf16>, vector<8x128xf32> -> vector<8x128xf32>
    %c8_i32_29 = arith.constant 8 : i32
    %103 = arith.muli %c3_i32, %c8_i32_29 : i32
    %104 = tpu.assume_multiple %103, 8 : i32
    %105 = arith.index_cast %104 : i32 to index
    %c0_30 = arith.constant 0 : index
    %106 = vector.load %arg7[%105, %c0_30] : memref<64x128xf32, #tpu.memory_space<vmem>>, vector<8x128xf32>
    %107 = arith.addf %106, %102 : vector<8x128xf32>
    %108 = vector.extract_strided_slice %107 {offsets = [0, 0], sizes = [8, 96], strides = [1, 1]} : vector<8x128xf32> to vector<8x96xf32>
    %109 = arith.negf %108 : vector<8x96xf32>
    %110 = math.exp %109 : vector<8x96xf32>
    %cst_31 = arith.constant 1.000000e+00 : f32
    %111 = vector.broadcast %cst_31 : f32 to vector<8x96xf32>
    %112 = arith.addf %111, %110 : vector<8x96xf32>
    %113 = arith.divf %111, %112 : vector<8x96xf32>
    %114 = vector.extract_strided_slice %107 {offsets = [0, 96], sizes = [8, 32], strides = [1, 1]} : vector<8x128xf32> to vector<8x32xf32>
    %115 = math.tanh %114 : vector<8x32xf32>
    %116 = vector.extract_strided_slice %113 {offsets = [0, 32], sizes = [8, 32], strides = [1, 1]} : vector<8x96xf32> to vector<8x32xf32>
    %117 = arith.mulf %116, %93 : vector<8x32xf32>
    %118 = vector.extract_strided_slice %113 {offsets = [0, 0], sizes = [8, 32], strides = [1, 1]} : vector<8x96xf32> to vector<8x32xf32>
    %119 = arith.mulf %118, %115 : vector<8x32xf32>
    %120 = arith.addf %117, %119 : vector<8x32xf32>
    %121 = vector.extract_strided_slice %113 {offsets = [0, 64], sizes = [8, 32], strides = [1, 1]} : vector<8x96xf32> to vector<8x32xf32>
    %122 = math.tanh %120 : vector<8x32xf32>
    %123 = arith.mulf %121, %122 : vector<8x32xf32>
    %124 = arith.index_cast %104 : i32 to index
    %c0_32 = arith.constant 0 : index
    %125 = vector.load %arg4[%124, %c0_32] : memref<64x32xf32, #tpu.memory_space<vmem>>, vector<8x32xf32>
    tpu.vector_store %arg4[%124, %c0_32], %123 {strides = array<i32>} : memref<64x32xf32, #tpu.memory_space<vmem>>, vector<8x32xf32>,
    %126 = tpu.concatenate %123, %123 in 1 : vector<8x32xf32>, vector<8x32xf32> -> vector<8x64xf32>
    %127 = arith.mulf %126, %17 : vector<8x64xf32>
    %c4_i32_33 = arith.constant 4 : i32
    %128 = arith.truncf %127 : vector<8x64xf32> to vector<8x64xbf16>
    %cst_34 = arith.constant dense<0.000000e+00> : vector<8x128xf32>
    %129 = tpu.matmul %128, %7, %cst_34 {dimension_numbers = #tpu.dot_dimension_numbers<[1], [0], [0], [1], [0, 0, 1, 1], [], []>} : vector<8x64xbf16>, vector<64x128xbf16>, vector<8x128xf32> -> vector<8x128xf32>
    %c8_i32_35 = arith.constant 8 : i32
    %130 = arith.muli %c4_i32_33, %c8_i32_35 : i32
    %131 = tpu.assume_multiple %130, 8 : i32
    %132 = arith.index_cast %131 : i32 to index
    %c0_36 = arith.constant 0 : index
    %133 = vector.load %arg7[%132, %c0_36] : memref<64x128xf32, #tpu.memory_space<vmem>>, vector<8x128xf32>
    %134 = arith.addf %133, %129 : vector<8x128xf32>
    %135 = vector.extract_strided_slice %134 {offsets = [0, 0], sizes = [8, 96], strides = [1, 1]} : vector<8x128xf32> to vector<8x96xf32>
    %136 = arith.negf %135 : vector<8x96xf32>
    %137 = math.exp %136 : vector<8x96xf32>
    %cst_37 = arith.constant 1.000000e+00 : f32
    %138 = vector.broadcast %cst_37 : f32 to vector<8x96xf32>
    %139 = arith.addf %138, %137 : vector<8x96xf32>
    %140 = arith.divf %138, %139 : vector<8x96xf32>
    %141 = vector.extract_strided_slice %134 {offsets = [0, 96], sizes = [8, 32], strides = [1, 1]} : vector<8x128xf32> to vector<8x32xf32>
    %142 = math.tanh %141 : vector<8x32xf32>
    %143 = vector.extract_strided_slice %140 {offsets = [0, 32], sizes = [8, 32], strides = [1, 1]} : vector<8x96xf32> to vector<8x32xf32>
    %144 = arith.mulf %143, %120 : vector<8x32xf32>
    %145 = vector.extract_strided_slice %140 {offsets = [0, 0], sizes = [8, 32], strides = [1, 1]} : vector<8x96xf32> to vector<8x32xf32>
    %146 = arith.mulf %145, %142 : vector<8x32xf32>
    %147 = arith.addf %144, %146 : vector<8x32xf32>
    %148 = vector.extract_strided_slice %140 {offsets = [0, 64], sizes = [8, 32], strides = [1, 1]} : vector<8x96xf32> to vector<8x32xf32>
    %149 = math.tanh %147 : vector<8x32xf32>
    %150 = arith.mulf %148, %149 : vector<8x32xf32>
    %151 = arith.index_cast %131 : i32 to index
    %c0_38 = arith.constant 0 : index
    %152 = vector.load %arg4[%151, %c0_38] : memref<64x32xf32, #tpu.memory_space<vmem>>, vector<8x32xf32>
    tpu.vector_store %arg4[%151, %c0_38], %150 {strides = array<i32>} : memref<64x32xf32, #tpu.memory_space<vmem>>, vector<8x32xf32>,
    %153 = tpu.concatenate %150, %150 in 1 : vector<8x32xf32>, vector<8x32xf32> -> vector<8x64xf32>
    %154 = arith.mulf %153, %17 : vector<8x64xf32>
    %c5_i32 = arith.constant 5 : i32
    %155 = arith.truncf %154 : vector<8x64xf32> to vector<8x64xbf16>
    %cst_39 = arith.constant dense<0.000000e+00> : vector<8x128xf32>
    %156 = tpu.matmul %155, %7, %cst_39 {dimension_numbers = #tpu.dot_dimension_numbers<[1], [0], [0], [1], [0, 0, 1, 1], [], []>} : vector<8x64xbf16>, vector<64x128xbf16>, vector<8x128xf32> -> vector<8x128xf32>
    %c8_i32_40 = arith.constant 8 : i32
    %157 = arith.muli %c5_i32, %c8_i32_40 : i32
    %158 = tpu.assume_multiple %157, 8 : i32
    %159 = arith.index_cast %158 : i32 to index
    %c0_41 = arith.constant 0 : index
    %160 = vector.load %arg7[%159, %c0_41] : memref<64x128xf32, #tpu.memory_space<vmem>>, vector<8x128xf32>
    %161 = arith.addf %160, %156 : vector<8x128xf32>
    %162 = vector.extract_strided_slice %161 {offsets = [0, 0], sizes = [8, 96], strides = [1, 1]} : vector<8x128xf32> to vector<8x96xf32>
    %163 = arith.negf %162 : vector<8x96xf32>
    %164 = math.exp %163 : vector<8x96xf32>
    %cst_42 = arith.constant 1.000000e+00 : f32
    %165 = vector.broadcast %cst_42 : f32 to vector<8x96xf32>
    %166 = arith.addf %165, %164 : vector<8x96xf32>
    %167 = arith.divf %165, %166 : vector<8x96xf32>
    %168 = vector.extract_strided_slice %161 {offsets = [0, 96], sizes = [8, 32], strides = [1, 1]} : vector<8x128xf32> to vector<8x32xf32>
    %169 = math.tanh %168 : vector<8x32xf32>
    %170 = vector.extract_strided_slice %167 {offsets = [0, 32], sizes = [8, 32], strides = [1, 1]} : vector<8x96xf32> to vector<8x32xf32>
    %171 = arith.mulf %170, %147 : vector<8x32xf32>
    %172 = vector.extract_strided_slice %167 {offsets = [0, 0], sizes = [8, 32], strides = [1, 1]} : vector<8x96xf32> to vector<8x32xf32>
    %173 = arith.mulf %172, %169 : vector<8x32xf32>
    %174 = arith.addf %171, %173 : vector<8x32xf32>
    %175 = vector.extract_strided_slice %167 {offsets = [0, 64], sizes = [8, 32], strides = [1, 1]} : vector<8x96xf32> to vector<8x32xf32>
    %176 = math.tanh %174 : vector<8x32xf32>
    %177 = arith.mulf %175, %176 : vector<8x32xf32>
    %178 = arith.index_cast %158 : i32 to index
    %c0_43 = arith.constant 0 : index
    %179 = vector.load %arg4[%178, %c0_43] : memref<64x32xf32, #tpu.memory_space<vmem>>, vector<8x32xf32>
    tpu.vector_store %arg4[%178, %c0_43], %177 {strides = array<i32>} : memref<64x32xf32, #tpu.memory_space<vmem>>, vector<8x32xf32>,
    %180 = tpu.concatenate %177, %177 in 1 : vector<8x32xf32>, vector<8x32xf32> -> vector<8x64xf32>
    %181 = arith.mulf %180, %17 : vector<8x64xf32>
    %c6_i32 = arith.constant 6 : i32
    %182 = arith.truncf %181 : vector<8x64xf32> to vector<8x64xbf16>
    %cst_44 = arith.constant dense<0.000000e+00> : vector<8x128xf32>
    %183 = tpu.matmul %182, %7, %cst_44 {dimension_numbers = #tpu.dot_dimension_numbers<[1], [0], [0], [1], [0, 0, 1, 1], [], []>} : vector<8x64xbf16>, vector<64x128xbf16>, vector<8x128xf32> -> vector<8x128xf32>
    %c8_i32_45 = arith.constant 8 : i32
    %184 = arith.muli %c6_i32, %c8_i32_45 : i32
    %185 = tpu.assume_multiple %184, 8 : i32
    %186 = arith.index_cast %185 : i32 to index
    %c0_46 = arith.constant 0 : index
    %187 = vector.load %arg7[%186, %c0_46] : memref<64x128xf32, #tpu.memory_space<vmem>>, vector<8x128xf32>
    %188 = arith.addf %187, %183 : vector<8x128xf32>
    %189 = vector.extract_strided_slice %188 {offsets = [0, 0], sizes = [8, 96], strides = [1, 1]} : vector<8x128xf32> to vector<8x96xf32>
    %190 = arith.negf %189 : vector<8x96xf32>
    %191 = math.exp %190 : vector<8x96xf32>
    %cst_47 = arith.constant 1.000000e+00 : f32
    %192 = vector.broadcast %cst_47 : f32 to vector<8x96xf32>
    %193 = arith.addf %192, %191 : vector<8x96xf32>
    %194 = arith.divf %192, %193 : vector<8x96xf32>
    %195 = vector.extract_strided_slice %188 {offsets = [0, 96], sizes = [8, 32], strides = [1, 1]} : vector<8x128xf32> to vector<8x32xf32>
    %196 = math.tanh %195 : vector<8x32xf32>
    %197 = vector.extract_strided_slice %194 {offsets = [0, 32], sizes = [8, 32], strides = [1, 1]} : vector<8x96xf32> to vector<8x32xf32>
    %198 = arith.mulf %197, %174 : vector<8x32xf32>
    %199 = vector.extract_strided_slice %194 {offsets = [0, 0], sizes = [8, 32], strides = [1, 1]} : vector<8x96xf32> to vector<8x32xf32>
    %200 = arith.mulf %199, %196 : vector<8x32xf32>
    %201 = arith.addf %198, %200 : vector<8x32xf32>
    %202 = vector.extract_strided_slice %194 {offsets = [0, 64], sizes = [8, 32], strides = [1, 1]} : vector<8x96xf32> to vector<8x32xf32>
    %203 = math.tanh %201 : vector<8x32xf32>
    %204 = arith.mulf %202, %203 : vector<8x32xf32>
    %205 = arith.index_cast %185 : i32 to index
    %c0_48 = arith.constant 0 : index
    %206 = vector.load %arg4[%205, %c0_48] : memref<64x32xf32, #tpu.memory_space<vmem>>, vector<8x32xf32>
    tpu.vector_store %arg4[%205, %c0_48], %204 {strides = array<i32>} : memref<64x32xf32, #tpu.memory_space<vmem>>, vector<8x32xf32>,
    %207 = tpu.concatenate %204, %204 in 1 : vector<8x32xf32>, vector<8x32xf32> -> vector<8x64xf32>
    %208 = arith.mulf %207, %17 : vector<8x64xf32>
    %c7_i32 = arith.constant 7 : i32
    %209 = arith.truncf %208 : vector<8x64xf32> to vector<8x64xbf16>
    %cst_49 = arith.constant dense<0.000000e+00> : vector<8x128xf32>
    %210 = tpu.matmul %209, %7, %cst_49 {dimension_numbers = #tpu.dot_dimension_numbers<[1], [0], [0], [1], [0, 0, 1, 1], [], []>} : vector<8x64xbf16>, vector<64x128xbf16>, vector<8x128xf32> -> vector<8x128xf32>
    %c8_i32_50 = arith.constant 8 : i32
    %211 = arith.muli %c7_i32, %c8_i32_50 : i32
    %212 = tpu.assume_multiple %211, 8 : i32
    %213 = arith.index_cast %212 : i32 to index
    %c0_51 = arith.constant 0 : index
    %214 = vector.load %arg7[%213, %c0_51] : memref<64x128xf32, #tpu.memory_space<vmem>>, vector<8x128xf32>
    %215 = arith.addf %214, %210 : vector<8x128xf32>
    %216 = vector.extract_strided_slice %215 {offsets = [0, 0], sizes = [8, 96], strides = [1, 1]} : vector<8x128xf32> to vector<8x96xf32>
    %217 = arith.negf %216 : vector<8x96xf32>
    %218 = math.exp %217 : vector<8x96xf32>
    %cst_52 = arith.constant 1.000000e+00 : f32
    %219 = vector.broadcast %cst_52 : f32 to vector<8x96xf32>
    %220 = arith.addf %219, %218 : vector<8x96xf32>
    %221 = arith.divf %219, %220 : vector<8x96xf32>
    %222 = vector.extract_strided_slice %215 {offsets = [0, 96], sizes = [8, 32], strides = [1, 1]} : vector<8x128xf32> to vector<8x32xf32>
    %223 = math.tanh %222 : vector<8x32xf32>
    %224 = vector.extract_strided_slice %221 {offsets = [0, 32], sizes = [8, 32], strides = [1, 1]} : vector<8x96xf32> to vector<8x32xf32>
    %225 = arith.mulf %224, %201 : vector<8x32xf32>
    %226 = vector.extract_strided_slice %221 {offsets = [0, 0], sizes = [8, 32], strides = [1, 1]} : vector<8x96xf32> to vector<8x32xf32>
    %227 = arith.mulf %226, %223 : vector<8x32xf32>
    %228 = arith.addf %225, %227 : vector<8x32xf32>
    %229 = vector.extract_strided_slice %221 {offsets = [0, 64], sizes = [8, 32], strides = [1, 1]} : vector<8x96xf32> to vector<8x32xf32>
    %230 = math.tanh %228 : vector<8x32xf32>
    %231 = arith.mulf %229, %230 : vector<8x32xf32>
    %232 = arith.index_cast %212 : i32 to index
    %c0_53 = arith.constant 0 : index
    %233 = vector.load %arg4[%232, %c0_53] : memref<64x32xf32, #tpu.memory_space<vmem>>, vector<8x32xf32>
    tpu.vector_store %arg4[%232, %c0_53], %231 {strides = array<i32>} : memref<64x32xf32, #tpu.memory_space<vmem>>, vector<8x32xf32>,
    %234 = tpu.concatenate %231, %231 in 1 : vector<8x32xf32>, vector<8x32xf32> -> vector<8x64xf32>
    %235 = arith.mulf %234, %17 : vector<8x64xf32>
    %c8_i32_54 = arith.constant 8 : i32
    %c0_55 = arith.constant 0 : index
    %c0_56 = arith.constant 0 : index
    %236 = vector.load %arg5[%c0_55, %c0_56] : memref<8x64xf32, #tpu.memory_space<vmem>>, vector<8x64xf32>
    tpu.vector_store %arg5[%c0_55, %c0_56], %235 {strides = array<i32>} : memref<8x64xf32, #tpu.memory_space<vmem>>, vector<8x64xf32>,
    %c0_57 = arith.constant 0 : index
    %c0_58 = arith.constant 0 : index
    %237 = vector.load %arg6[%c0_57, %c0_58] : memref<8x32xf32, #tpu.memory_space<vmem>>, vector<8x32xf32>
    tpu.vector_store %arg6[%c0_57, %c0_58], %228 {strides = array<i32>} : memref<8x32xf32, #tpu.memory_space<vmem>>, vector<8x32xf32>,
    return
  }
  func.func @transform_0(%arg0: i32) -> (i32, i32) {
    %c0_i32 = arith.constant 0 : i32
    %c0_i32_0 = arith.constant 0 : i32
    return %arg0, %c0_i32 : i32, i32
  }
  func.func @transform_1(%arg0: i32) -> (i32, i32) {
    %c0_i32 = arith.constant 0 : i32
    %c0_i32_0 = arith.constant 0 : i32
    %c0_i32_1 = arith.constant 0 : i32
    return %c0_i32, %c0_i32_0 : i32, i32
  }
  func.func @transform_2(%arg0: i32) -> (i32, i32) {
    %c0_i32 = arith.constant 0 : i32
    %c0_i32_0 = arith.constant 0 : i32
    %c0_i32_1 = arith.constant 0 : i32
    return %c0_i32, %c0_i32_0 : i32, i32
  }
  func.func @transform_3(%arg0: i32) -> (i32, i32) {
    %c0_i32 = arith.constant 0 : i32
    %c0_i32_0 = arith.constant 0 : i32
    return %arg0, %c0_i32 : i32, i32
  }
}

</mosaic_0001>

<llo_original>
// kernel: complex_lstm_forward.1
$region0: #{complex_lstm_forward.1}
  #allocation0 [shape = 'u32[]', space=smem, size = 0x4, offset = 0x4, fixed_abs, tag = 'smem constant byte address 0x4 - core index']
  #allocation1 [shape = 'u32[144,128]{1,0:T(1,128)}', space=vmem, size = 0x12000, scoped, tag = 'internal scratch']
  #allocation2 [shape = 'f32[8,64]{1,0:T(8,128)}', space=vmem, size = 0x1000, scoped, tag = 'scratch operand']
  #allocation3 [shape = 'f32[8,32]{1,0:T(8,128)}', space=vmem, size = 0x1000, scoped, tag = 'scratch operand']
  #allocation4 [shape = 'f32[64,128]{1,0:T(8,128)}', space=vmem, size = 0x8000, scoped, tag = 'scratch operand']
  %s0 = inlined_call_operand.vmem [shape: bf16[64,34], index: 0, kind: input, shape index: {}]
  %s1 = inlined_call_operand.vmem [shape: bf16[34,128], index: 1, kind: input, shape index: {}]
  %s2 = inlined_call_operand.vmem [shape: bf16[64,128], index: 2, kind: input, shape index: {}]
  %s3 = inlined_call_operand.vmem [shape: f32[64,32], index: 3, kind: output, shape index: {}]
  %s4 = sld [smem:[#allocation0]]
  $region26: #{complex_lstm_forward.1} parent=0
    _
  %s6 = ssub.s32 1, %s4
  %s7 = scalar_select 0, %s6, %s4
  // Predicated region
  $region2: #{complex_lstm_forward.1} parent=0 // pred_check
    _
  $region3: #{complex_lstm_forward.1} parent=0 // pred_check_branch
    %9 = sbr.rel (0) target = $region5
  $region4: #{complex_lstm_forward.1} parent=0 // pred_region
    _
  $region5: #{complex_lstm_forward.1} parent=0 // pred_fallthru
    _
  // Predicated region
  $region6: #{complex_lstm_forward.1} parent=0 // pred_check
    _
  $region7: #{complex_lstm_forward.1} parent=0 // pred_check_branch
    %11 = sbr.rel (0) target = $region9
  $region8: #{complex_lstm_forward.1} parent=0 // pred_region
    _
  $region9: #{complex_lstm_forward.1} parent=0 // pred_fallthru
    _
  // Predicated region
  $region10: #{complex_lstm_forward.1} parent=0 // pred_check
    _
  $region11: #{complex_lstm_forward.1} parent=0 // pred_check_branch
    %13 = sbr.rel (0) target = $region13
  $region12: #{complex_lstm_forward.1} parent=0 // pred_region
    _
  $region13: #{complex_lstm_forward.1} parent=0 // pred_fallthru
    _
  %p15 = scmp.eq.s32.totalorder 0, 0
  // Predicated region
  $region14: #{complex_lstm_forward.1} parent=0 // pred_check
    %p16 = pneg %p15
  $region15: #{complex_lstm_forward.1} parent=0 // pred_check_branch
    %18 = sbr.rel (%p16) target = $region17
  $region16: #{complex_lstm_forward.1} parent=0 // pred_region
    %vm19 = vcmask 523264
    %20 = vst.msk [vmem:[#allocation2] sm:$0xff] %vm19, 0.0
    %vm21 = vcmask 261120
    %22 = vst.msk [vmem:[#allocation3] sm:$0xff] %vm21, 0.0
  $region17: #{complex_lstm_forward.1} parent=0 // pred_fallthru
    _
  %v23 = vld [vmem:[%s0] sm:$0xf]
  %v24 = vld [vmem:[%s0 + $0x4] sm:$0xf]
  %v25 = vld [vmem:[%s0 + $0x8] sm:$0xf]
  %v26 = vld [vmem:[%s0 + $0xc] sm:$0xf]
  %v27 = vld [vmem:[%s0 + $0x10] sm:$0xf]
  %v28 = vld [vmem:[%s0 + $0x14] sm:$0xf]
  %v29 = vld [vmem:[%s0 + $0x18] sm:$0xf]
  %v30 = vld [vmem:[%s0 + $0x1c] sm:$0xf]
  %v31 = vld [vmem:[%s1] sm:$0xf]
  %v32 = vld [vmem:[%s1 + $0x4] sm:$0xf]
  %v33 = vld [vmem:[%s1 + $0x8] sm:$0xf]
  %v34 = vld [vmem:[%s1 + $0xc] sm:$0xf]
  %v35 = vld [vmem:[%s1 + $0x10] sm:$0x1]
  %v44 = vunpack.c.l.b16 %v23
  %v45 = vunpack.c.l.b16 %v24
  %v46 = vunpack.c.l.b16 %v25
  %v47 = vunpack.c.l.b16 %v26
  %v48 = vunpack.c.l.b16 %v27
  %v49 = vunpack.c.l.b16 %v28
  %v50 = vunpack.c.l.b16 %v29
  %v51 = vunpack.c.l.b16 %v30
  %v52 = vpack.c.b16 %v45, %v44
  %v53 = vpack.c.b16 %v47, %v46
  %v54 = vpack.c.b16 %v49, %v48
  %v55 = vpack.c.b16 %v51, %v50
  %v61 = vunpack.c.l.b16 %v31
  %v62 = vunpack.c.l.b16 %v32
  %v63 = vunpack.c.l.b16 %v33
  %v64 = vunpack.c.l.b16 %v34
  %v65 = vunpack.c.l.b16 %v35
  %v66 = vpack.c.b16 %v62, %v61
  %v67 = vpack.c.b16 %v64, %v63
  %v68 = vpack.c.b16 %v65, %v65
  %vm71 = vcmask 277504
  %v73 = vsel %vm71, %v52, 0
  %v76 = vsel %vm71, %v53, 0
  %v79 = vsel %vm71, %v54, 0
  %v82 = vsel %vm71, %v55, 0
  %vm84 = vcmask 1040384
  %v86 = vsel %vm84, %v68, 0
  %88 = vmatprep.subr.bf16.mxu0 0
  %89 = vmatpush1.bf16.msra.mxu0 0
  %90 = vmatprep.subr.bf16.mxu0 0
  %91 = vmatpush1.bf16.msra.mxu0 0
  %92 = vmatprep.subr.bf16.mxu0 0
  %93 = vmatpush1.bf16.msra.mxu0 0
  %94 = vmatprep.subr.bf16.mxu0 0
  %95 = vmatpush1.bf16.msra.mxu0 0
  %96 = vmatprep.subr.bf16.mxu0 0
  %97 = vmatpush1.bf16.msra.mxu0 0
  %98 = vmatprep.subr.bf16.mxu0 0
  %99 = vmatpush1.bf16.msra.mxu0 %v86
  %100 = vmatprep.subr.bf16.mxu0 0
  %101 = vmatpush1.bf16.msra.mxu0 %v67
  %102 = vmatprep.subr.bf16.mxu0 0
  %103 = vmatpush1.bf16.msra.mxu0 %v66
  %104 = vmatprep.subr.bf16.mxu0 0
  %105 = vmatpush2.bf16.msra.mxu0 0
  %106 = vmatprep.subr.bf16.mxu0 0
  %107 = vmatpush2.bf16.msra.mxu0 0
  %108 = vmatprep.subr.bf16.mxu0 0
  %109 = vmatpush2.bf16.msra.mxu0 0
  %110 = vmatprep.subr.bf16.mxu0 0
  %111 = vmatpush2.bf16.msra.mxu0 0
  %112 = vmatprep.subr.bf16.mxu0 0
  %113 = vmatpush2.bf16.msra.mxu0 0
  %114 = vmatprep.subr.bf16.mxu0 0
  %115 = vmatpush2.bf16.msra.mxu0 0
  %116 = vmatprep.subr.bf16.mxu0 0
  %117 = vmatpush2.bf16.msra.mxu0 0
  %118 = vmatprep.subr.bf16.mxu0 0
  %119 = vmatpush2.bf16.msra.mxu0 0
  %120 = vmatprep.mubr.bf16.mxu0 0
  %121 = vmatmul.mubr.bf16.gmra.mxu0 %v73
  %v122 = vpop.f32.mrf.mxu0
  %v123 = vadd.f32 0.0, %v122
  %v124 = vpop.f32.mrf.mxu0
  %v125 = vpop.f32.mrf.mxu0
  %v126 = vadd.f32 0.0, %v125
  %v127 = vpop.f32.mrf.mxu0
  %128 = vmatprep.mubr.bf16.mxu0 0
  %129 = vmatmul.mubr.bf16.gmra.mxu0 %v76
  %v130 = vpop.f32.mrf.mxu0
  %v131 = vadd.f32 0.0, %v130
  %v132 = vpop.f32.mrf.mxu0
  %v133 = vpop.f32.mrf.mxu0
  %v134 = vadd.f32 0.0, %v133
  %v135 = vpop.f32.mrf.mxu0
  %136 = vmatprep.mubr.bf16.mxu0 0
  %137 = vmatmul.mubr.bf16.gmra.mxu0 %v79
  %v138 = vpop.f32.mrf.mxu0
  %v139 = vadd.f32 0.0, %v138
  %v140 = vpop.f32.mrf.mxu0
  %v141 = vpop.f32.mrf.mxu0
  %v142 = vadd.f32 0.0, %v141
  %v143 = vpop.f32.mrf.mxu0
  %144 = vmatprep.mubr.bf16.mxu0 0
  %145 = vmatmul.mubr.bf16.gmra.mxu0 %v82
  %v146 = vpop.f32.mrf.mxu0
  %v147 = vadd.f32 0.0, %v146
  %v148 = vpop.f32.mrf.mxu0
  %v149 = vpop.f32.mrf.mxu0
  %v150 = vadd.f32 0.0, %v149
  %v151 = vpop.f32.mrf.mxu0
  %152 = vdwg.mxu0
  %153 = vst [vmem:[#allocation4] sm:$0xff] %v123
  %154 = vst [vmem:[#allocation4 + $0x8] sm:$0xff] %v126
  %155 = vst [vmem:[#allocation4 + $0x10] sm:$0xff] %v131
  %156 = vst [vmem:[#allocation4 + $0x18] sm:$0xff] %v134
  %157 = vst [vmem:[#allocation4 + $0x20] sm:$0xff] %v139
  %158 = vst [vmem:[#allocation4 + $0x28] sm:$0xff] %v142
  %159 = vst [vmem:[#allocation4 + $0x30] sm:$0xff] %v147
  %160 = vst [vmem:[#allocation4 + $0x38] sm:$0xff] %v150
  %v161 = vld [vmem:[%s2] sm:$0xf]
  %v162 = vld [vmem:[%s2 + $0x4] sm:$0xf]
  %v163 = vld [vmem:[%s2 + $0x8] sm:$0xf]
  %v164 = vld [vmem:[%s2 + $0xc] sm:$0xf]
  %v165 = vld [vmem:[%s2 + $0x10] sm:$0xf]
  %v166 = vld [vmem:[%s2 + $0x14] sm:$0xf]
  %v167 = vld [vmem:[%s2 + $0x18] sm:$0xf]
  %v168 = vld [vmem:[%s2 + $0x1c] sm:$0xf]
  %v169 = vlaneseq
  %v170 = vshrl.u32 %v169, 7
  %v171 = vlaneseq
  %v172 = vand.u32 %v171, 127
  %vm173 = vcmp.lt.s32.totalorder %v170, 4
  %vm174 = vcmp.lt.s32.totalorder %v172, 32
  %vm175 = vmxor %vm173, %vm174
  %vm176 = vmxor %vm175, 1
  %v177 = vsel %vm176, 1, 0
  %v178 = vcvt.s32.f32 %v177
  %v179 = vld [vmem:[#allocation2] sm:$0xff]
  %v180 = vld [vmem:[#allocation3] sm:$0xff]
  %v181 = vpack.c.bf16 %v179, %v179
  %v190 = vunpack.c.l.b16 %v161
  %v191 = vunpack.c.l.b16 %v162
  %v192 = vunpack.c.l.b16 %v163
  %v193 = vunpack.c.l.b16 %v164
  %v194 = vunpack.c.l.b16 %v165
  %v195 = vunpack.c.l.b16 %v166
  %v196 = vunpack.c.l.b16 %v167
  %v197 = vunpack.c.l.b16 %v168
  %v198 = vpack.c.b16 %v191, %v190
  %v199 = vpack.c.b16 %v193, %v192
  %v200 = vpack.c.b16 %v195, %v194
  %v201 = vpack.c.b16 %v197, %v196
  %vm206 = vcmask 523264
  %v208 = vsel %vm206, %v181, 0
  %210 = vmatprep.subr.bf16.mxu0 0
  %211 = vmatpush1.bf16.msra.mxu0 0
  %212 = vmatprep.subr.bf16.mxu0 0
  %213 = vmatpush1.bf16.msra.mxu0 0
  %214 = vmatprep.subr.bf16.mxu0 0
  %215 = vmatpush1.bf16.msra.mxu0 0
  %216 = vmatprep.subr.bf16.mxu0 0
  %217 = vmatpush1.bf16.msra.mxu0 0
  %218 = vmatprep.subr.bf16.mxu0 0
  %219 = vmatpush1.bf16.msra.mxu0 %v201
  %220 = vmatprep.subr.bf16.mxu0 0
  %221 = vmatpush1.bf16.msra.mxu0 %v200
  %222 = vmatprep.subr.bf16.mxu0 0
  %223 = vmatpush1.bf16.msra.mxu0 %v199
  %224 = vmatprep.subr.bf16.mxu0 0
  %225 = vmatpush1.bf16.msra.mxu0 %v198
  %226 = vmatprep.subr.bf16.mxu0 0
  %227 = vmatpush2.bf16.msra.mxu0 0
  %228 = vmatprep.subr.bf16.mxu0 0
  %229 = vmatpush2.bf16.msra.mxu0 0
  %230 = vmatprep.subr.bf16.mxu0 0
  %231 = vmatpush2.bf16.msra.mxu0 0
  %232 = vmatprep.subr.bf16.mxu0 0
  %233 = vmatpush2.bf16.msra.mxu0 0
  %234 = vmatprep.subr.bf16.mxu0 0
  %235 = vmatpush2.bf16.msra.mxu0 0
  %236 = vmatprep.subr.bf16.mxu0 0
  %237 = vmatpush2.bf16.msra.mxu0 0
  %238 = vmatprep.subr.bf16.mxu0 0
  %239 = vmatpush2.bf16.msra.mxu0 0
  %240 = vmatprep.subr.bf16.mxu0 0
  %241 = vmatpush2.bf16.msra.mxu0 0
  %242 = vmatprep.mubr.bf16.mxu0 0
  %243 = vmatmul.mubr.bf16.gmra.mxu0 %v208
  %v244 = vpop.f32.mrf.mxu0
  %v245 = vadd.f32 0.0, %v244
  %v246 = vpop.f32.mrf.mxu0
  %v247 = vpop.f32.mrf.mxu0
  %v248 = vpop.f32.mrf.mxu0
  %249 = vdwg.mxu0
  %v250 = vld [vmem:[#allocation4] sm:$0xff]
  %v251 = vadd.f32 %v250, %v245
  %v252 = vxor.u32 %v251, 2147483648
  %v253 = vmul.f32 %v252, 1.442695
  %v254 = vpow.pop %v253
  %v255 = vadd.f32 %v254, 1.0
  %v256 = vrcp.pop %v255
  %v257 = vmul.f32 1.0, %v256
  %v258 = vtanh.pop %v251
  %260 = vrot.lane.b32.xlu0 %v180, 32
  %v261 = vpop.permute.xlu0 %260
  %v263 = vmul.f32 %v257, %v261
  %265 = vrot.lane.b32.xlu0 %v258, 32
  %v266 = vpop.permute.xlu0 %265
  %v268 = vmul.f32 %v257, %v266
  %270 = vrot.lane.b32.xlu0 %v268, 32
  %v271 = vpop.permute.xlu0 %270
  %v273 = vadd.f32 %v263, %v271
  %v274 = vtanh.pop %v273
  %276 = vrot.lane.b32.xlu0 %v274, 32
  %v277 = vpop.permute.xlu0 %276
  %v279 = vmul.f32 %v257, %v277
  %281 = vrot.lane.b32.xlu0 %v279, 64
  %v282 = vpop.permute.xlu0 %281
  %vm284 = vcmask 261120
  %285 = vst.msk [vmem:[%s3] sm:$0xff] %vm284, %v282
  %286 = vrot.lane.b32.xlu0 %v279, 96
  %v287 = vpop.permute.xlu0 %286
  %v289 = vsel %vm284, %v282, %v287
  %v290 = vmul.f32 %v289, %v178
  %v291 = vpack.c.bf16 %v290, %v290
  %v293 = vsel %vm206, %v291, 0
  %295 = vmatprep.subr.bf16.mxu0 0
  %296 = vmatpush1.bf16.msra.mxu0 0
  %297 = vmatprep.subr.bf16.mxu0 0
  %298 = vmatpush1.bf16.msra.mxu0 0
  %299 = vmatprep.subr.bf16.mxu0 0
  %300 = vmatpush1.bf16.msra.mxu0 0
  %301 = vmatprep.subr.bf16.mxu0 0
  %302 = vmatpush1.bf16.msra.mxu0 0
  %303 = vmatprep.subr.bf16.mxu0 0
  %304 = vmatpush1.bf16.msra.mxu0 %v201
  %305 = vmatprep.subr.bf16.mxu0 0
  %306 = vmatpush1.bf16.msra.mxu0 %v200
  %307 = vmatprep.subr.bf16.mxu0 0
  %308 = vmatpush1.bf16.msra.mxu0 %v199
  %309 = vmatprep.subr.bf16.mxu0 0
  %310 = vmatpush1.bf16.msra.mxu0 %v198
  %311 = vmatprep.subr.bf16.mxu0 0
  %312 = vmatpush2.bf16.msra.mxu0 0
  %313 = vmatprep.subr.bf16.mxu0 0
  %314 = vmatpush2.bf16.msra.mxu0 0
  %315 = vmatprep.subr.bf16.mxu0 0
  %316 = vmatpush2.bf16.msra.mxu0 0
  %317 = vmatprep.subr.bf16.mxu0 0
  %318 = vmatpush2.bf16.msra.mxu0 0
  %319 = vmatprep.subr.bf16.mxu0 0
  %320 = vmatpush2.bf16.msra.mxu0 0
  %321 = vmatprep.subr.bf16.mxu0 0
  %322 = vmatpush2.bf16.msra.mxu0 0
  %323 = vmatprep.subr.bf16.mxu0 0
  %324 = vmatpush2.bf16.msra.mxu0 0
  %325 = vmatprep.subr.bf16.mxu0 0
  %326 = vmatpush2.bf16.msra.mxu0 0
  %327 = vmatprep.mubr.bf16.mxu0 0
  %328 = vmatmul.mubr.bf16.gmra.mxu0 %v293
  %v329 = vpop.f32.mrf.mxu0
  %v330 = vadd.f32 0.0, %v329
  %v331 = vpop.f32.mrf.mxu0
  %v332 = vpop.f32.mrf.mxu0
  %v333 = vpop.f32.mrf.mxu0
  %334 = vdwg.mxu0
  %s335 = scalar_lea.vmem [#allocation4], 8
  %v336 = vld [vmem:[%s335] sm:$0xff]
  %v337 = vadd.f32 %v336, %v330
  %v338 = vxor.u32 %v337, 2147483648
  %v339 = vmul.f32 %v338, 1.442695
  %v340 = vpow.pop %v339
  %v341 = vadd.f32 %v340, 1.0
  %v342 = vrcp.pop %v341
  %v343 = vmul.f32 1.0, %v342
  %v344 = vtanh.pop %v337
  %v345 = vmul.f32 %v343, %v273
  %347 = vrot.lane.b32.xlu0 %v344, 32
  %v348 = vpop.permute.xlu0 %347
  %v350 = vmul.f32 %v343, %v348
  %352 = vrot.lane.b32.xlu0 %v350, 32
  %v353 = vpop.permute.xlu0 %352
  %v355 = vadd.f32 %v345, %v353
  %v356 = vtanh.pop %v355
  %358 = vrot.lane.b32.xlu0 %v356, 32
  %v359 = vpop.permute.xlu0 %358
  %v361 = vmul.f32 %v343, %v359
  %363 = vrot.lane.b32.xlu0 %v361, 64
  %v364 = vpop.permute.xlu0 %363
  %s366 = scalar_lea.vmem %s3, 8
  %367 = vst.msk [vmem:[%s366] sm:$0xff] %vm284, %v364
  %368 = vrot.lane.b32.xlu0 %v361, 96
  %v369 = vpop.permute.xlu0 %368
  %v371 = vsel %vm284, %v364, %v369
  %v372 = vmul.f32 %v371, %v178
  %v373 = vpack.c.bf16 %v372, %v372
  %v375 = vsel %vm206, %v373, 0
  %377 = vmatprep.subr.bf16.mxu0 0
  %378 = vmatpush1.bf16.msra.mxu0 0
  %379 = vmatprep.subr.bf16.mxu0 0
  %380 = vmatpush1.bf16.msra.mxu0 0
  %381 = vmatprep.subr.bf16.mxu0 0
  %382 = vmatpush1.bf16.msra.mxu0 0
  %383 = vmatprep.subr.bf16.mxu0 0
  %384 = vmatpush1.bf16.msra.mxu0 0
  %385 = vmatprep.subr.bf16.mxu0 0
  %386 = vmatpush1.bf16.msra.mxu0 %v201
  %387 = vmatprep.subr.bf16.mxu0 0
  %388 = vmatpush1.bf16.msra.mxu0 %v200
  %389 = vmatprep.subr.bf16.mxu0 0
  %390 = vmatpush1.bf16.msra.mxu0 %v199
  %391 = vmatprep.subr.bf16.mxu0 0
  %392 = vmatpush1.bf16.msra.mxu0 %v198
  %393 = vmatprep.subr.bf16.mxu0 0
  %394 = vmatpush2.bf16.msra.mxu0 0
  %395 = vmatprep.subr.bf16.mxu0 0
  %396 = vmatpush2.bf16.msra.mxu0 0
  %397 = vmatprep.subr.bf16.mxu0 0
  %398 = vmatpush2.bf16.msra.mxu0 0
  %399 = vmatprep.subr.bf16.mxu0 0
  %400 = vmatpush2.bf16.msra.mxu0 0
  %401 = vmatprep.subr.bf16.mxu0 0
  %402 = vmatpush2.bf16.msra.mxu0 0
  %403 = vmatprep.subr.bf16.mxu0 0
  %404 = vmatpush2.bf16.msra.mxu0 0
  %405 = vmatprep.subr.bf16.mxu0 0
  %406 = vmatpush2.bf16.msra.mxu0 0
  %407 = vmatprep.subr.bf16.mxu0 0
  %408 = vmatpush2.bf16.msra.mxu0 0
  %409 = vmatprep.mubr.bf16.mxu0 0
  %410 = vmatmul.mubr.bf16.gmra.mxu0 %v375
  %v411 = vpop.f32.mrf.mxu0
  %v412 = vadd.f32 0.0, %v411
  %v413 = vpop.f32.mrf.mxu0
  %v414 = vpop.f32.mrf.mxu0
  %v415 = vpop.f32.mrf.mxu0
  %416 = vdwg.mxu0
  %s417 = scalar_lea.vmem [#allocation4], 16
  %v418 = vld [vmem:[%s417] sm:$0xff]
  %v419 = vadd.f32 %v418, %v412
  %v420 = vxor.u32 %v419, 2147483648
  %v421 = vmul.f32 %v420, 1.442695
  %v422 = vpow.pop %v421
  %v423 = vadd.f32 %v422, 1.0
  %v424 = vrcp.pop %v423
  %v425 = vmul.f32 1.0, %v424
  %v426 = vtanh.pop %v419
  %v427 = vmul.f32 %v425, %v355
  %429 = vrot.lane.b32.xlu0 %v426, 32
  %v430 = vpop.permute.xlu0 %429
  %v432 = vmul.f32 %v425, %v430
  %434 = vrot.lane.b32.xlu0 %v432, 32
  %v435 = vpop.permute.xlu0 %434
  %v437 = vadd.f32 %v427, %v435
  %v438 = vtanh.pop %v437
  %440 = vrot.lane.b32.xlu0 %v438, 32
  %v441 = vpop.permute.xlu0 %440
  %v443 = vmul.f32 %v425, %v441
  %445 = vrot.lane.b32.xlu0 %v443, 64
  %v446 = vpop.permute.xlu0 %445
  %s448 = scalar_lea.vmem %s3, 16
  %449 = vst.msk [vmem:[%s448] sm:$0xff] %vm284, %v446
  %450 = vrot.lane.b32.xlu0 %v443, 96
  %v451 = vpop.permute.xlu0 %450
  %v453 = vsel %vm284, %v446, %v451
  %v454 = vmul.f32 %v453, %v178
  %v455 = vpack.c.bf16 %v454, %v454
  %v457 = vsel %vm206, %v455, 0
  %459 = vmatprep.subr.bf16.mxu0 0
  %460 = vmatpush1.bf16.msra.mxu0 0
  %461 = vmatprep.subr.bf16.mxu0 0
  %462 = vmatpush1.bf16.msra.mxu0 0
  %463 = vmatprep.subr.bf16.mxu0 0
  %464 = vmatpush1.bf16.msra.mxu0 0
  %465 = vmatprep.subr.bf16.mxu0 0
  %466 = vmatpush1.bf16.msra.mxu0 0
  %467 = vmatprep.subr.bf16.mxu0 0
  %468 = vmatpush1.bf16.msra.mxu0 %v201
  %469 = vmatprep.subr.bf16.mxu0 0
  %470 = vmatpush1.bf16.msra.mxu0 %v200
  %471 = vmatprep.subr.bf16.mxu0 0
  %472 = vmatpush1.bf16.msra.mxu0 %v199
  %473 = vmatprep.subr.bf16.mxu0 0
  %474 = vmatpush1.bf16.msra.mxu0 %v198
  %475 = vmatprep.subr.bf16.mxu0 0
  %476 = vmatpush2.bf16.msra.mxu0 0
  %477 = vmatprep.subr.bf16.mxu0 0
  %478 = vmatpush2.bf16.msra.mxu0 0
  %479 = vmatprep.subr.bf16.mxu0 0
  %480 = vmatpush2.bf16.msra.mxu0 0
  %481 = vmatprep.subr.bf16.mxu0 0
  %482 = vmatpush2.bf16.msra.mxu0 0
  %483 = vmatprep.subr.bf16.mxu0 0
  %484 = vmatpush2.bf16.msra.mxu0 0
  %485 = vmatprep.subr.bf16.mxu0 0
  %486 = vmatpush2.bf16.msra.mxu0 0
  %487 = vmatprep.subr.bf16.mxu0 0
  %488 = vmatpush2.bf16.msra.mxu0 0
  %489 = vmatprep.subr.bf16.mxu0 0
  %490 = vmatpush2.bf16.msra.mxu0 0
  %491 = vmatprep.mubr.bf16.mxu0 0
  %492 = vmatmul.mubr.bf16.gmra.mxu0 %v457
  %v493 = vpop.f32.mrf.mxu0
  %v494 = vadd.f32 0.0, %v493
  %v495 = vpop.f32.mrf.mxu0
  %v496 = vpop.f32.mrf.mxu0
  %v497 = vpop.f32.mrf.mxu0
  %498 = vdwg.mxu0
  %s499 = scalar_lea.vmem [#allocation4], 24
  %v500 = vld [vmem:[%s499] sm:$0xff]
  %v501 = vadd.f32 %v500, %v494
  %v502 = vxor.u32 %v501, 2147483648
  %v503 = vmul.f32 %v502, 1.442695
  %v504 = vpow.pop %v503
  %v505 = vadd.f32 %v504, 1.0
  %v506 = vrcp.pop %v505
  %v507 = vmul.f32 1.0, %v506
  %v508 = vtanh.pop %v501
  %v509 = vmul.f32 %v507, %v437
  %511 = vrot.lane.b32.xlu0 %v508, 32
  %v512 = vpop.permute.xlu0 %511
  %v514 = vmul.f32 %v507, %v512
  %516 = vrot.lane.b32.xlu0 %v514, 32
  %v517 = vpop.permute.xlu0 %516
  %v519 = vadd.f32 %v509, %v517
  %v520 = vtanh.pop %v519
  %522 = vrot.lane.b32.xlu0 %v520, 32
  %v523 = vpop.permute.xlu0 %522
  %v525 = vmul.f32 %v507, %v523
  %527 = vrot.lane.b32.xlu0 %v525, 64
  %v528 = vpop.permute.xlu0 %527
  %s530 = scalar_lea.vmem %s3, 24
  %531 = vst.msk [vmem:[%s530] sm:$0xff] %vm284, %v528
  %532 = vrot.lane.b32.xlu0 %v525, 96
  %v533 = vpop.permute.xlu0 %532
  %v535 = vsel %vm284, %v528, %v533
  %v536 = vmul.f32 %v535, %v178
  %v537 = vpack.c.bf16 %v536, %v536
  %v539 = vsel %vm206, %v537, 0
  %541 = vmatprep.subr.bf16.mxu0 0
  %542 = vmatpush1.bf16.msra.mxu0 0
  %543 = vmatprep.subr.bf16.mxu0 0
  %544 = vmatpush1.bf16.msra.mxu0 0
  %545 = vmatprep.subr.bf16.mxu0 0
  %546 = vmatpush1.bf16.msra.mxu0 0
  %547 = vmatprep.subr.bf16.mxu0 0
  %548 = vmatpush1.bf16.msra.mxu0 0
  %549 = vmatprep.subr.bf16.mxu0 0
  %550 = vmatpush1.bf16.msra.mxu0 %v201
  %551 = vmatprep.subr.bf16.mxu0 0
  %552 = vmatpush1.bf16.msra.mxu0 %v200
  %553 = vmatprep.subr.bf16.mxu0 0
  %554 = vmatpush1.bf16.msra.mxu0 %v199
  %555 = vmatprep.subr.bf16.mxu0 0
  %556 = vmatpush1.bf16.msra.mxu0 %v198
  %557 = vmatprep.subr.bf16.mxu0 0
  %558 = vmatpush2.bf16.msra.mxu0 0
  %559 = vmatprep.subr.bf16.mxu0 0
  %560 = vmatpush2.bf16.msra.mxu0 0
  %561 = vmatprep.subr.bf16.mxu0 0
  %562 = vmatpush2.bf16.msra.mxu0 0
  %563 = vmatprep.subr.bf16.mxu0 0
  %564 = vmatpush2.bf16.msra.mxu0 0
  %565 = vmatprep.subr.bf16.mxu0 0
  %566 = vmatpush2.bf16.msra.mxu0 0
  %567 = vmatprep.subr.bf16.mxu0 0
  %568 = vmatpush2.bf16.msra.mxu0 0
  %569 = vmatprep.subr.bf16.mxu0 0
  %570 = vmatpush2.bf16.msra.mxu0 0
  %571 = vmatprep.subr.bf16.mxu0 0
  %572 = vmatpush2.bf16.msra.mxu0 0
  %573 = vmatprep.mubr.bf16.mxu0 0
  %574 = vmatmul.mubr.bf16.gmra.mxu0 %v539
  %v575 = vpop.f32.mrf.mxu0
  %v576 = vadd.f32 0.0, %v575
  %v577 = vpop.f32.mrf.mxu0
  %v578 = vpop.f32.mrf.mxu0
  %v579 = vpop.f32.mrf.mxu0
  %580 = vdwg.mxu0
  %s581 = scalar_lea.vmem [#allocation4], 32
  %v582 = vld [vmem:[%s581] sm:$0xff]
  %v583 = vadd.f32 %v582, %v576
  %v584 = vxor.u32 %v583, 2147483648
  %v585 = vmul.f32 %v584, 1.442695
  %v586 = vpow.pop %v585
  %v587 = vadd.f32 %v586, 1.0
  %v588 = vrcp.pop %v587
  %v589 = vmul.f32 1.0, %v588
  %v590 = vtanh.pop %v583
  %v591 = vmul.f32 %v589, %v519
  %593 = vrot.lane.b32.xlu0 %v590, 32
  %v594 = vpop.permute.xlu0 %593
  %v596 = vmul.f32 %v589, %v594
  %598 = vrot.lane.b32.xlu0 %v596, 32
  %v599 = vpop.permute.xlu0 %598
  %v601 = vadd.f32 %v591, %v599
  %v602 = vtanh.pop %v601
  %604 = vrot.lane.b32.xlu0 %v602, 32
  %v605 = vpop.permute.xlu0 %604
  %v607 = vmul.f32 %v589, %v605
  %609 = vrot.lane.b32.xlu0 %v607, 64
  %v610 = vpop.permute.xlu0 %609
  %s612 = scalar_lea.vmem %s3, 32
  %613 = vst.msk [vmem:[%s612] sm:$0xff] %vm284, %v610
  %614 = vrot.lane.b32.xlu0 %v607, 96
  %v615 = vpop.permute.xlu0 %614
  %v617 = vsel %vm284, %v610, %v615
  %v618 = vmul.f32 %v617, %v178
  %v619 = vpack.c.bf16 %v618, %v618
  %v621 = vsel %vm206, %v619, 0
  %623 = vmatprep.subr.bf16.mxu0 0
  %624 = vmatpush1.bf16.msra.mxu0 0
  %625 = vmatprep.subr.bf16.mxu0 0
  %626 = vmatpush1.bf16.msra.mxu0 0
  %627 = vmatprep.subr.bf16.mxu0 0
  %628 = vmatpush1.bf16.msra.mxu0 0
  %629 = vmatprep.subr.bf16.mxu0 0
  %630 = vmatpush1.bf16.msra.mxu0 0
  %631 = vmatprep.subr.bf16.mxu0 0
  %632 = vmatpush1.bf16.msra.mxu0 %v201
  %633 = vmatprep.subr.bf16.mxu0 0
  %634 = vmatpush1.bf16.msra.mxu0 %v200
  %635 = vmatprep.subr.bf16.mxu0 0
  %636 = vmatpush1.bf16.msra.mxu0 %v199
  %637 = vmatprep.subr.bf16.mxu0 0
  %638 = vmatpush1.bf16.msra.mxu0 %v198
  %639 = vmatprep.subr.bf16.mxu0 0
  %640 = vmatpush2.bf16.msra.mxu0 0
  %641 = vmatprep.subr.bf16.mxu0 0
  %642 = vmatpush2.bf16.msra.mxu0 0
  %643 = vmatprep.subr.bf16.mxu0 0
  %644 = vmatpush2.bf16.msra.mxu0 0
  %645 = vmatprep.subr.bf16.mxu0 0
  %646 = vmatpush2.bf16.msra.mxu0 0
  %647 = vmatprep.subr.bf16.mxu0 0
  %648 = vmatpush2.bf16.msra.mxu0 0
  %649 = vmatprep.subr.bf16.mxu0 0
  %650 = vmatpush2.bf16.msra.mxu0 0
  %651 = vmatprep.subr.bf16.mxu0 0
  %652 = vmatpush2.bf16.msra.mxu0 0
  %653 = vmatprep.subr.bf16.mxu0 0
  %654 = vmatpush2.bf16.msra.mxu0 0
  %655 = vmatprep.mubr.bf16.mxu0 0
  %656 = vmatmul.mubr.bf16.gmra.mxu0 %v621
  %v657 = vpop.f32.mrf.mxu0
  %v658 = vadd.f32 0.0, %v657
  %v659 = vpop.f32.mrf.mxu0
  %v660 = vpop.f32.mrf.mxu0
  %v661 = vpop.f32.mrf.mxu0
  %662 = vdwg.mxu0
  %s663 = scalar_lea.vmem [#allocation4], 40
  %v664 = vld [vmem:[%s663] sm:$0xff]
  %v665 = vadd.f32 %v664, %v658
  %v666 = vxor.u32 %v665, 2147483648
  %v667 = vmul.f32 %v666, 1.442695
  %v668 = vpow.pop %v667
  %v669 = vadd.f32 %v668, 1.0
  %v670 = vrcp.pop %v669
  %v671 = vmul.f32 1.0, %v670
  %v672 = vtanh.pop %v665
  %v673 = vmul.f32 %v671, %v601
  %675 = vrot.lane.b32.xlu0 %v672, 32
  %v676 = vpop.permute.xlu0 %675
  %v678 = vmul.f32 %v671, %v676
  %680 = vrot.lane.b32.xlu0 %v678, 32
  %v681 = vpop.permute.xlu0 %680
  %v683 = vadd.f32 %v673, %v681
  %v684 = vtanh.pop %v683
  %686 = vrot.lane.b32.xlu0 %v684, 32
  %v687 = vpop.permute.xlu0 %686
  %v689 = vmul.f32 %v671, %v687
  %691 = vrot.lane.b32.xlu0 %v689, 64
  %v692 = vpop.permute.xlu0 %691
  %s694 = scalar_lea.vmem %s3, 40
  %695 = vst.msk [vmem:[%s694] sm:$0xff] %vm284, %v692
  %696 = vrot.lane.b32.xlu0 %v689, 96
  %v697 = vpop.permute.xlu0 %696
  %v699 = vsel %vm284, %v692, %v697
  %v700 = vmul.f32 %v699, %v178
  %v701 = vpack.c.bf16 %v700, %v700
  %v703 = vsel %vm206, %v701, 0
  %705 = vmatprep.subr.bf16.mxu0 0
  %706 = vmatpush1.bf16.msra.mxu0 0
  %707 = vmatprep.subr.bf16.mxu0 0
  %708 = vmatpush1.bf16.msra.mxu0 0
  %709 = vmatprep.subr.bf16.mxu0 0
  %710 = vmatpush1.bf16.msra.mxu0 0
  %711 = vmatprep.subr.bf16.mxu0 0
  %712 = vmatpush1.bf16.msra.mxu0 0
  %713 = vmatprep.subr.bf16.mxu0 0
  %714 = vmatpush1.bf16.msra.mxu0 %v201
  %715 = vmatprep.subr.bf16.mxu0 0
  %716 = vmatpush1.bf16.msra.mxu0 %v200
  %717 = vmatprep.subr.bf16.mxu0 0
  %718 = vmatpush1.bf16.msra.mxu0 %v199
  %719 = vmatprep.subr.bf16.mxu0 0
  %720 = vmatpush1.bf16.msra.mxu0 %v198
  %721 = vmatprep.subr.bf16.mxu0 0
  %722 = vmatpush2.bf16.msra.mxu0 0
  %723 = vmatprep.subr.bf16.mxu0 0
  %724 = vmatpush2.bf16.msra.mxu0 0
  %725 = vmatprep.subr.bf16.mxu0 0
  %726 = vmatpush2.bf16.msra.mxu0 0
  %727 = vmatprep.subr.bf16.mxu0 0
  %728 = vmatpush2.bf16.msra.mxu0 0
  %729 = vmatprep.subr.bf16.mxu0 0
  %730 = vmatpush2.bf16.msra.mxu0 0
  %731 = vmatprep.subr.bf16.mxu0 0
  %732 = vmatpush2.bf16.msra.mxu0 0
  %733 = vmatprep.subr.bf16.mxu0 0
  %734 = vmatpush2.bf16.msra.mxu0 0
  %735 = vmatprep.subr.bf16.mxu0 0
  %736 = vmatpush2.bf16.msra.mxu0 0
  %737 = vmatprep.mubr.bf16.mxu0 0
  %738 = vmatmul.mubr.bf16.gmra.mxu0 %v703
  %v739 = vpop.f32.mrf.mxu0
  %v740 = vadd.f32 0.0, %v739
  %v741 = vpop.f32.mrf.mxu0
  %v742 = vpop.f32.mrf.mxu0
  %v743 = vpop.f32.mrf.mxu0
  %744 = vdwg.mxu0
  %s745 = scalar_lea.vmem [#allocation4], 48
  %v746 = vld [vmem:[%s745] sm:$0xff]
  %v747 = vadd.f32 %v746, %v740
  %v748 = vxor.u32 %v747, 2147483648
  %v749 = vmul.f32 %v748, 1.442695
  %v750 = vpow.pop %v749
  %v751 = vadd.f32 %v750, 1.0
  %v752 = vrcp.pop %v751
  %v753 = vmul.f32 1.0, %v752
  %v754 = vtanh.pop %v747
  %v755 = vmul.f32 %v753, %v683
  %757 = vrot.lane.b32.xlu0 %v754, 32
  %v758 = vpop.permute.xlu0 %757
  %v760 = vmul.f32 %v753, %v758
  %762 = vrot.lane.b32.xlu0 %v760, 32
  %v763 = vpop.permute.xlu0 %762
  %v765 = vadd.f32 %v755, %v763
  %v766 = vtanh.pop %v765
  %768 = vrot.lane.b32.xlu0 %v766, 32
  %v769 = vpop.permute.xlu0 %768
  %v771 = vmul.f32 %v753, %v769
  %773 = vrot.lane.b32.xlu0 %v771, 64
  %v774 = vpop.permute.xlu0 %773
  %s776 = scalar_lea.vmem %s3, 48
  %777 = vst.msk [vmem:[%s776] sm:$0xff] %vm284, %v774
  %778 = vrot.lane.b32.xlu0 %v771, 96
  %v779 = vpop.permute.xlu0 %778
  %v781 = vsel %vm284, %v774, %v779
  %v782 = vmul.f32 %v781, %v178
  %v783 = vpack.c.bf16 %v782, %v782
  %v785 = vsel %vm206, %v783, 0
  %787 = vmatprep.subr.bf16.mxu0 0
  %788 = vmatpush1.bf16.msra.mxu0 0
  %789 = vmatprep.subr.bf16.mxu0 0
  %790 = vmatpush1.bf16.msra.mxu0 0
  %791 = vmatprep.subr.bf16.mxu0 0
  %792 = vmatpush1.bf16.msra.mxu0 0
  %793 = vmatprep.subr.bf16.mxu0 0
  %794 = vmatpush1.bf16.msra.mxu0 0
  %795 = vmatprep.subr.bf16.mxu0 0
  %796 = vmatpush1.bf16.msra.mxu0 %v201
  %797 = vmatprep.subr.bf16.mxu0 0
  %798 = vmatpush1.bf16.msra.mxu0 %v200
  %799 = vmatprep.subr.bf16.mxu0 0
  %800 = vmatpush1.bf16.msra.mxu0 %v199
  %801 = vmatprep.subr.bf16.mxu0 0
  %802 = vmatpush1.bf16.msra.mxu0 %v198
  %803 = vmatprep.subr.bf16.mxu0 0
  %804 = vmatpush2.bf16.msra.mxu0 0
  %805 = vmatprep.subr.bf16.mxu0 0
  %806 = vmatpush2.bf16.msra.mxu0 0
  %807 = vmatprep.subr.bf16.mxu0 0
  %808 = vmatpush2.bf16.msra.mxu0 0
  %809 = vmatprep.subr.bf16.mxu0 0
  %810 = vmatpush2.bf16.msra.mxu0 0
  %811 = vmatprep.subr.bf16.mxu0 0
  %812 = vmatpush2.bf16.msra.mxu0 0
  %813 = vmatprep.subr.bf16.mxu0 0
  %814 = vmatpush2.bf16.msra.mxu0 0
  %815 = vmatprep.subr.bf16.mxu0 0
  %816 = vmatpush2.bf16.msra.mxu0 0
  %817 = vmatprep.subr.bf16.mxu0 0
  %818 = vmatpush2.bf16.msra.mxu0 0
  %819 = vmatprep.mubr.bf16.mxu0 0
  %820 = vmatmul.mubr.bf16.gmra.mxu0 %v785
  %v821 = vpop.f32.mrf.mxu0
  %v822 = vadd.f32 0.0, %v821
  %v823 = vpop.f32.mrf.mxu0
  %v824 = vpop.f32.mrf.mxu0
  %v825 = vpop.f32.mrf.mxu0
  %826 = vdwg.mxu0
  %s827 = scalar_lea.vmem [#allocation4], 56
  %v828 = vld [vmem:[%s827] sm:$0xff]
  %v829 = vadd.f32 %v828, %v822
  %v830 = vxor.u32 %v829, 2147483648
  %v831 = vmul.f32 %v830, 1.442695
  %v832 = vpow.pop %v831
  %v833 = vadd.f32 %v832, 1.0
  %v834 = vrcp.pop %v833
  %v835 = vmul.f32 1.0, %v834
  %v836 = vtanh.pop %v829
  %v837 = vmul.f32 %v835, %v765
  %839 = vrot.lane.b32.xlu0 %v836, 32
  %v840 = vpop.permute.xlu0 %839
  %v842 = vmul.f32 %v835, %v840
  %844 = vrot.lane.b32.xlu0 %v842, 32
  %v845 = vpop.permute.xlu0 %844
  %v847 = vadd.f32 %v837, %v845
  %v848 = vtanh.pop %v847
  %850 = vrot.lane.b32.xlu0 %v848, 32
  %v851 = vpop.permute.xlu0 %850
  %v853 = vmul.f32 %v835, %v851
  %855 = vrot.lane.b32.xlu0 %v853, 64
  %v856 = vpop.permute.xlu0 %855
  %s858 = scalar_lea.vmem %s3, 56
  %859 = vst.msk [vmem:[%s858] sm:$0xff] %vm284, %v856
  %860 = vrot.lane.b32.xlu0 %v853, 96
  %v861 = vpop.permute.xlu0 %860
  %v863 = vsel %vm284, %v856, %v861
  %v864 = vmul.f32 %v863, %v178
  %865 = vst.msk [vmem:[#allocation2] sm:$0xff] %vm206, %v864
  %867 = vrot.lane.b32.xlu0 %v847, 96
  %v868 = vpop.permute.xlu0 %867
  %870 = vst.msk [vmem:[#allocation3] sm:$0xff] %vm284, %v868
  // Predicated region
  $region18: #{complex_lstm_forward.1} parent=0 // pred_check
    _
  $region19: #{complex_lstm_forward.1} parent=0 // pred_check_branch
    %872 = sbr.rel (0) target = $region21
  $region20: #{complex_lstm_forward.1} parent=0 // pred_region
    _
  $region21: #{complex_lstm_forward.1} parent=0 // pred_fallthru
    _
  // Predicated region
  $region22: #{complex_lstm_forward.1} parent=0 // pred_check
    _
  $region23: #{complex_lstm_forward.1} parent=0 // pred_check_branch
    %874 = sbr.rel (0) target = $region25
  $region24: #{complex_lstm_forward.1} parent=0 // pred_region
    _
  $region25: #{complex_lstm_forward.1} parent=0 // pred_fallthru
    _

</llo_original>
